<compile_context>
chip_gen: v7x
topology: tpu7x:2x2x1
jax: 0.10.0
libtpu: 0.0.40
codegen_flags: <defaults>
</compile_context>

<pallas_src>
import functools

import jax
import jax.numpy as jnp
from jax.experimental import pallas as pl
from jax.experimental.pallas import tpu as pltpu


def _round_up(v, mult):
    return (v + mult - 1) // mult * mult


def _cosface_kernel(pp_ref, x_ref, w_ref, xs_ref, winv_ref, col_ref, lab_ref,
                    l_ref, wfy_acc, sexp_acc, *, m, pad_cols):
    """One (tm, tc) tile of the cosface loss.

    pp_ref   : (1, 1)  f32 SMEM     -- positive_parameter (softmax scale)
    x_ref    : (tm, D)              -- input rows (native dtype)
    w_ref    : (tc, D)              -- weight rows (native dtype)
    xs_ref   : (tm, 1) f32          -- pp / ||x_i||   (precomputed row scale)
    winv_ref : (1, tc) f32          -- 1 / ||w_j||    (precomputed col scale)
    col_ref  : (1, tc) int32        -- global class ids for this C tile
    lab_ref  : (tm, 1) int32        -- labels for this N tile
    l_ref    : (tm, 1) f32          -- per-sample L (written on last C tile)
    wfy_acc  : (tm, 1) f32 scratch  -- pp*(wf_y - 1) accumulated over C tiles
    sexp_acc : (tm, 1) f32 scratch  -- sum_j exp(pp*(wf_j - 1)) over C tiles
    """
    j = pl.program_id(1)

    @pl.when(j == 0)
    def _init():
        wfy_acc[...] = jnp.zeros_like(wfy_acc)
        sexp_acc[...] = jnp.zeros_like(sexp_acc)

    pp = pp_ref[0, 0]

    # Raw logits on the MXU: contract the last dim of both operands -> (tm, tc),
    # f32 accumulation, no explicit transpose of W.
    wf_raw = jax.lax.dot_general(
        x_ref[...], w_ref[...], (((1,), (1,)), ((), ())),
        preferred_element_type=jnp.float32)

    # Shifted, pp-scaled cosine logits: wf_s = pp*(cos - 1) in [-2*pp, 0].
    wf_s = wf_raw * xs_ref[...] * winv_ref[...] - pp            # (tm, tc)

    # Label column extraction + shifted exp-sum over all columns of this tile.
    onehot = col_ref[...] == lab_ref[...]                       # (tm, tc)
    wfy_acc[...] += jnp.sum(jnp.where(onehot, wf_s, 0.0), axis=1, keepdims=True)
    sexp_acc[...] += jnp.sum(jnp.exp(wf_s), axis=1, keepdims=True)

    @pl.when(j == pl.num_programs(1) - 1)
    def _finalize():
        wfy_s = wfy_acc[...]                                    # pp*(wf_y - 1)
        s_all = sexp_acc[...]
        if pad_cols:  # static: zero-padded class columns each contributed exp(-pp)
            s_all = s_all - jnp.float32(pad_cols) * jnp.exp(-pp)
        # Remove the label column; clamp against f32 cancellation.
        s_excl = jnp.maximum(s_all - jnp.exp(wfy_s), 0.0)
        numerator = wfy_s + pp * (1.0 - m)                      # = pp*(wf_y - m)
        # log(den) = pp + log(exp(num - pp) + s_excl),  num - pp = wfy_s - pp*m
        l_ref[...] = numerator - pp - jnp.log(jnp.exp(wfy_s - pp * m) + s_excl)


def angular_penalty_sm_loss(x, weight, labels, class_weight, positive_parameter,
                            m=0.2, block_n=256, block_c=512):
    """cosface AngularPenaltySMLoss forward. Returns (loss, positive_parameter)."""
    n, d = x.shape
    c, d_w = weight.shape
    assert d == d_w

    # Sublane-aligned N tile, lane-aligned (multiple-of-128) C tile, lane-dense D.
    tm = min(block_n, _round_up(n, 8))
    tc = min(block_c, _round_up(c, 128))
    n_pad = _round_up(n, tm)
    c_pad = _round_up(c, tc)
    d_pad = _round_up(d, 128)

    x_p = jnp.pad(x, ((0, n_pad - n), (0, d_pad - d)))
    w_p = jnp.pad(weight, ((0, c_pad - c), (0, d_pad - d)))
    lab_p = jnp.pad(labels.astype(jnp.int32), (0, n_pad - n)).reshape(n_pad, 1)
    col_ids = jnp.arange(c_pad, dtype=jnp.int32).reshape(1, c_pad)
    pp_f32 = jnp.asarray(positive_parameter, jnp.float32)
    pp_arr = pp_f32.reshape(1, 1)

    # Hoisted L2 normalization (F.normalize eps=1e-12 on the norm), computed
    # from the same (possibly bf16-rounded) values that feed the MXU; pp is
    # folded into the per-row scale.
    x32 = x_p.astype(jnp.float32)
    w32 = w_p.astype(jnp.float32)
    x_scale = pp_f32 * jax.lax.rsqrt(
        jnp.maximum(jnp.sum(x32 * x32, axis=1, keepdims=True), 1e-24))  # (n_pad, 1)
    w_inv_row = jax.lax.rsqrt(
        jnp.maximum(jnp.sum(w32 * w32, axis=1), 1e-24)).reshape(1, c_pad)

    grid = (n_pad // tm, c_pad // tc)
    itemsize = int(x.dtype.itemsize)

    kernel = functools.partial(_cosface_kernel, m=float(m), pad_cols=c_pad - c)

    per_row_L = pl.pallas_call(
        kernel,
        out_shape=jax.ShapeDtypeStruct((n_pad, 1), jnp.float32),
        grid_spec=pltpu.PrefetchScalarGridSpec(
            num_scalar_prefetch=0,
            grid=grid,
            in_specs=[
                pl.BlockSpec((1, 1), lambda i, j: (0, 0),
                             memory_space=pltpu.SMEM),              # positive_parameter
                pl.BlockSpec((tm, d_pad), lambda i, j: (i, 0)),     # x
                pl.BlockSpec((tc, d_pad), lambda i, j: (j, 0)),     # weight
                pl.BlockSpec((tm, 1), lambda i, j: (i, 0)),         # pp/||x|| row scale
                pl.BlockSpec((1, tc), lambda i, j: (0, j)),         # 1/||w|| col scale
                pl.BlockSpec((1, tc), lambda i, j: (0, j)),         # global column ids
                pl.BlockSpec((tm, 1), lambda i, j: (i, 0)),         # labels
            ],
            out_specs=pl.BlockSpec((tm, 1), lambda i, j: (i, 0)),
            scratch_shapes=[pltpu.VMEM((tm, 1), jnp.float32),       # wfy_acc
                            pltpu.VMEM((tm, 1), jnp.float32)],      # sexp_acc
        ),
        compiler_params=pltpu.CompilerParams(
            dimension_semantics=("parallel", "arbitrary"),
            vmem_limit_bytes=48 * 1024 * 1024),
        cost_estimate=pl.CostEstimate(
            flops=2 * n_pad * c_pad * d_pad,
            transcendentals=n_pad * c_pad,
            bytes_accessed=(n_pad * d_pad + grid[0] * c_pad * d_pad) * itemsize
                           + (n_pad + c_pad) * 4 + n_pad * 8),
    )(pp_arr, x_p, w_p, x_scale, w_inv_row, col_ids, lab_p)

    # TODO(synk): on v7x, if profiling shows the 2-TC shared HBM is the bound,
    # split the C axis across cores and combine partial accumulators instead.
    L = per_row_L[:n, 0]
    cw = class_weight.astype(jnp.float32).reshape(-1)
    loss = -jnp.mean(L * cw)
    return loss, positive_parameter


def _reference(x, w, labels, cw, pp, m=0.2):
    """Pure-JAX transcription of the PyTorch forward (cosface)."""
    x_n = x / jnp.maximum(jnp.linalg.norm(x, axis=1, keepdims=True), 1e-12)
    w_n = w / jnp.maximum(jnp.linalg.norm(w, axis=1, keepdims=True), 1e-12)
    wf = x_n @ w_n.T
    wf_y = wf[jnp.arange(x.shape[0]), labels]
    num = pp * (wf_y - m)
    onehot = jax.nn.one_hot(labels, w.shape[0], dtype=bool)
    sum_excl = jnp.sum(jnp.where(onehot, 0.0, jnp.exp(pp * wf)), axis=1)
    den = jnp.exp(num) + sum_excl
    L = num - jnp.log(den)
    return -jnp.mean(L * cw)            # cw is (N,): per-sample weight, like PyTorch


if __name__ == "__main__":
    # Small but grid-exercising shapes: N=16, in_features=32, out_features=200.
    N, IN_F, OUT_F = 16, 32, 200
    key = jax.random.PRNGKey(0)
    kx, kw, kl, kc = jax.random.split(key, 4)

    x = jax.random.normal(kx, (N, IN_F), dtype=jnp.float32)
    # Deterministic stand-in for nn.Linear(in_features, out_features, bias=False).weight
    weight = jax.random.normal(kw, (OUT_F, IN_F), dtype=jnp.float32) * 0.1
    labels = jax.random.randint(kl, (N,), 0, OUT_F, dtype=jnp.int32)
    class_weight = jax.random.uniform(kc, (N,), dtype=jnp.float32) + 0.5
    positive_parameter = 30.0

    # Small tiles so the (2, 2) grid, accumulation across C tiles, the padded
    # class-column correction and the D-padding path are all exercised.
    loss, pp_out = angular_penalty_sm_loss(
        x, weight, labels, class_weight, positive_parameter,
        block_n=8, block_c=128)
    loss = jax.block_until_ready(loss)

    ref = _reference(x, weight, labels, class_weight, positive_parameter)
    assert jnp.allclose(loss, ref, rtol=1e-4, atol=1e-4), (loss, ref)
    assert pp_out == positive_parameter

    # Default (production) tile sizes: single-tile grid at this size.
    loss_d, _ = angular_penalty_sm_loss(
        x, weight, labels, class_weight, positive_parameter)
    loss_d = jax.block_until_ready(loss_d)
    assert jnp.allclose(loss_d, ref, rtol=1e-4, atol=1e-4), (loss_d, ref)

    # Production path: bf16 inputs on the MXU, f32 accumulation / math.
    loss_bf16, _ = angular_penalty_sm_loss(
        x.astype(jnp.bfloat16), weight.astype(jnp.bfloat16), labels,
        class_weight, positive_parameter, block_n=8, block_c=128)
    loss_bf16 = jax.block_until_ready(loss_bf16)
    assert jnp.allclose(loss_bf16, ref, rtol=0.15), (loss_bf16, ref)

    print("KERNEL_OK")
</pallas_src>

<mosaic_0001>
module attributes {stable_mosaic.version = 11 : i64} {
  func.func @_cosface_kernel(%arg0: i32, %arg1: i32, %arg2: memref<1x1xf32, #tpu.memory_space<smem>>, %arg3: memref<8x128xf32, #tpu.memory_space<vmem>>, %arg4: memref<128x128xf32, #tpu.memory_space<vmem>>, %arg5: memref<8x1xf32, #tpu.memory_space<vmem>>, %arg6: memref<1x128xf32, #tpu.memory_space<vmem>>, %arg7: memref<1x128xi32, #tpu.memory_space<vmem>>, %arg8: memref<8x1xi32, #tpu.memory_space<vmem>>, %arg9: memref<8x1xf32, #tpu.memory_space<vmem>>, %arg10: memref<8x1xf32, #tpu.memory_space<vmem>>, %arg11: memref<8x1xf32, #tpu.memory_space<vmem>>) attributes {dimension_semantics = [#tpu.dimension_semantics<parallel>, #tpu.dimension_semantics<arbitrary>], iteration_bounds = array<i64: 2, 2>, scalar_prefetch = 0 : i64, scratch_operands = 2 : i64, tpu.core_type = #tpu.core_type<tc>, window_params = [{transform_indices = @transform_0, window_bounds = array<i64: 1, 1>}, {transform_indices = @transform_1, window_bounds = array<i64: 8, 128>}, {transform_indices = @transform_2, window_bounds = array<i64: 128, 128>}, {transform_indices = @transform_3, window_bounds = array<i64: 8, 1>}, {transform_indices = @transform_4, window_bounds = array<i64: 1, 128>}, {transform_indices = @transform_5, window_bounds = array<i64: 1, 128>}, {transform_indices = @transform_6, window_bounds = array<i64: 8, 1>}, {transform_indices = @transform_7, window_bounds = array<i64: 8, 1>}]} {
    %c0_i32 = arith.constant 0 : i32
    %0 = arith.cmpi eq, %arg1, %c0_i32 : i32
    %1 = arith.extui %0 : i1 to i32
    %c0_i32_0 = arith.constant 0 : i32
    %2 = arith.cmpi ne, %1, %c0_i32_0 : i32
    scf.if %2 {
      %cst_26 = arith.constant 0.000000e+00 : f32
      %36 = vector.broadcast %cst_26 : f32 to vector<8x1xf32>
      %c0_27 = arith.constant 0 : index
      %c0_28 = arith.constant 0 : index
      %37 = vector.load %arg10[%c0_27, %c0_28] : memref<8x1xf32, #tpu.memory_space<vmem>>, vector<8x1xf32>
      tpu.vector_store %arg10[%c0_27, %c0_28], %36 {strides = array<i32>} : memref<8x1xf32, #tpu.memory_space<vmem>>, vector<8x1xf32>,
      %cst_29 = arith.constant 0.000000e+00 : f32
      %38 = vector.broadcast %cst_29 : f32 to vector<8x1xf32>
      %c0_30 = arith.constant 0 : index
      %c0_31 = arith.constant 0 : index
      %39 = vector.load %arg11[%c0_30, %c0_31] : memref<8x1xf32, #tpu.memory_space<vmem>>, vector<8x1xf32>
      tpu.vector_store %arg11[%c0_30, %c0_31], %38 {strides = array<i32>} : memref<8x1xf32, #tpu.memory_space<vmem>>, vector<8x1xf32>,
    } else {
    }
    %c0 = arith.constant 0 : index
    %c0_1 = arith.constant 0 : index
    %3 = memref.load %arg2[%c0, %c0_1] : memref<1x1xf32, #tpu.memory_space<smem>>
    %c0_2 = arith.constant 0 : index
    %c0_3 = arith.constant 0 : index
    %4 = vector.load %arg3[%c0_2, %c0_3] : memref<8x128xf32, #tpu.memory_space<vmem>>, vector<8x128xf32>
    %c0_4 = arith.constant 0 : index
    %c0_5 = arith.constant 0 : index
    %5 = vector.load %arg4[%c0_4, %c0_5] : memref<128x128xf32, #tpu.memory_space<vmem>>, vector<128x128xf32>
    %cst = arith.constant dense<0.000000e+00> : vector<8x128xf32>
    %6 = tpu.matmul %4, %5, %cst {dimension_numbers = #tpu.dot_dimension_numbers<[1], [1], [0], [0], [0, 0, 1, 0], [], []>} : vector<8x128xf32>, vector<128x128xf32>, vector<8x128xf32> -> vector<8x128xf32>
    %c0_6 = arith.constant 0 : index
    %c0_7 = arith.constant 0 : index
    %7 = vector.load %arg5[%c0_6, %c0_7] : memref<8x1xf32, #tpu.memory_space<vmem>>, vector<8x1xf32>
    %8 = vector.broadcast %7 : vector<8x1xf32> to vector<8x128xf32>
    %9 = arith.mulf %6, %8 : vector<8x128xf32>
    %c0_8 = arith.constant 0 : index
    %c0_9 = arith.constant 0 : index
    %10 = vector.load %arg6[%c0_8, %c0_9] : memref<1x128xf32, #tpu.memory_space<vmem>>, vector<1x128xf32>
    %11 = vector.broadcast %10 : vector<1x128xf32> to vector<8x128xf32>
    %12 = arith.mulf %9, %11 : vector<8x128xf32>
    %13 = vector.broadcast %3 : f32 to vector<8x128xf32>
    %14 = arith.subf %12, %13 : vector<8x128xf32>
    %c0_10 = arith.constant 0 : index
    %c0_11 = arith.constant 0 : index
    %15 = vector.load %arg7[%c0_10, %c0_11] : memref<1x128xi32, #tpu.memory_space<vmem>>, vector<1x128xi32>
    %c0_12 = arith.constant 0 : index
    %c0_13 = arith.constant 0 : index
    %16 = vector.load %arg8[%c0_12, %c0_13] : memref<8x1xi32, #tpu.memory_space<vmem>>, vector<8x1xi32>
    %17 = vector.broadcast %15 : vector<1x128xi32> to vector<8x128xi32>
    %18 = vector.broadcast %16 : vector<8x1xi32> to vector<8x128xi32>
    %19 = arith.cmpi eq, %17, %18 : vector<8x128xi32>
    %c0_14 = arith.constant 0 : index
    %c0_15 = arith.constant 0 : index
    %20 = vector.load %arg10[%c0_14, %c0_15] : memref<8x1xf32, #tpu.memory_space<vmem>>, vector<8x1xf32>
    %cst_16 = arith.constant 0.000000e+00 : f32
    %21 = vector.broadcast %cst_16 : f32 to vector<8x128xf32>
    %22 = arith.select %19, %14, %21 : vector<8x128xi1>, vector<8x128xf32>
    %cst_17 = arith.constant dense<0.000000e+00> : vector<8xf32>
    %23 = vector.multi_reduction <add>, %22, %cst_17 [1] : vector<8x128xf32> to vector<8xf32>
    %24 = vector.shape_cast %23 : vector<8xf32> to vector<8x1xf32>
    %25 = arith.addf %20, %24 : vector<8x1xf32>
    %c0_18 = arith.constant 0 : index
    %c0_19 = arith.constant 0 : index
    %26 = vector.load %arg10[%c0_18, %c0_19] : memref<8x1xf32, #tpu.memory_space<vmem>>, vector<8x1xf32>
    tpu.vector_store %arg10[%c0_18, %c0_19], %25 {strides = array<i32>} : memref<8x1xf32, #tpu.memory_space<vmem>>, vector<8x1xf32>,
    %c0_20 = arith.constant 0 : index
    %c0_21 = arith.constant 0 : index
    %27 = vector.load %arg11[%c0_20, %c0_21] : memref<8x1xf32, #tpu.memory_space<vmem>>, vector<8x1xf32>
    %28 = math.exp %14 : vector<8x128xf32>
    %cst_22 = arith.constant dense<0.000000e+00> : vector<8xf32>
    %29 = vector.multi_reduction <add>, %28, %cst_22 [1] : vector<8x128xf32> to vector<8xf32>
    %30 = vector.shape_cast %29 : vector<8xf32> to vector<8x1xf32>
    %31 = arith.addf %27, %30 : vector<8x1xf32>
    %c0_23 = arith.constant 0 : index
    %c0_24 = arith.constant 0 : index
    %32 = vector.load %arg11[%c0_23, %c0_24] : memref<8x1xf32, #tpu.memory_space<vmem>>, vector<8x1xf32>
    tpu.vector_store %arg11[%c0_23, %c0_24], %31 {strides = array<i32>} : memref<8x1xf32, #tpu.memory_space<vmem>>, vector<8x1xf32>,
    %c1_i32 = arith.constant 1 : i32
    %33 = arith.cmpi eq, %arg1, %c1_i32 : i32
    %34 = arith.extui %33 : i1 to i32
    %c0_i32_25 = arith.constant 0 : i32
    %35 = arith.cmpi ne, %34, %c0_i32_25 : i32
    scf.if %35 {
      %c0_26 = arith.constant 0 : index
      %c0_27 = arith.constant 0 : index
      %36 = vector.load %arg10[%c0_26, %c0_27] : memref<8x1xf32, #tpu.memory_space<vmem>>, vector<8x1xf32>
      %c0_28 = arith.constant 0 : index
      %c0_29 = arith.constant 0 : index
      %37 = vector.load %arg11[%c0_28, %c0_29] : memref<8x1xf32, #tpu.memory_space<vmem>>, vector<8x1xf32>
      %cst_30 = arith.constant 0.000000e+00 : f32
      %38 = arith.subf %cst_30, %3 : f32
      %39 = math.exp %38 : f32
      %cst_31 = arith.constant 5.600000e+01 : f32
      %40 = arith.mulf %cst_31, %39 : f32
      %41 = vector.broadcast %40 : f32 to vector<8x1xf32>
      %42 = arith.subf %37, %41 : vector<8x1xf32>
      %43 = math.exp %36 : vector<8x1xf32>
      %44 = arith.subf %42, %43 : vector<8x1xf32>
      %cst_32 = arith.constant 0.000000e+00 : f32
      %45 = vector.broadcast %cst_32 : f32 to vector<8x1xf32>
      %46 = arith.maximumf %44, %45 : vector<8x1xf32>
      %cst_33 = arith.constant 8.000000e-01 : f32
      %47 = arith.mulf %3, %cst_33 : f32
      %48 = vector.broadcast %47 : f32 to vector<8x1xf32>
      %49 = arith.addf %36, %48 : vector<8x1xf32>
      %50 = vector.broadcast %3 : f32 to vector<8x1xf32>
      %51 = arith.subf %49, %50 : vector<8x1xf32>
      %cst_34 = arith.constant 2.000000e-01 : f32
      %52 = arith.mulf %3, %cst_34 : f32
      %53 = vector.broadcast %52 : f32 to vector<8x1xf32>
      %54 = arith.subf %36, %53 : vector<8x1xf32>
      %55 = math.exp %54 : vector<8x1xf32>
      %56 = arith.addf %55, %46 : vector<8x1xf32>
      %57 = math.log %56 : vector<8x1xf32>
      %58 = arith.subf %51, %57 : vector<8x1xf32>
      %c0_35 = arith.constant 0 : index
      %c0_36 = arith.constant 0 : index
      %59 = vector.load %arg9[%c0_35, %c0_36] : memref<8x1xf32, #tpu.memory_space<vmem>>, vector<8x1xf32>
      tpu.vector_store %arg9[%c0_35, %c0_36], %58 {strides = array<i32>} : memref<8x1xf32, #tpu.memory_space<vmem>>, vector<8x1xf32>,
    } else {
    }
    return
  }
  func.func @transform_0(%arg0: i32, %arg1: i32) -> (i32, i32) {
    %c0_i32 = arith.constant 0 : i32
    %c0_i32_0 = arith.constant 0 : i32
    %c0_i32_1 = arith.constant 0 : i32
    return %c0_i32, %c0_i32_0 : i32, i32
  }
  func.func @transform_1(%arg0: i32, %arg1: i32) -> (i32, i32) {
    %c0_i32 = arith.constant 0 : i32
    %c0_i32_0 = arith.constant 0 : i32
    return %arg0, %c0_i32 : i32, i32
  }
  func.func @transform_2(%arg0: i32, %arg1: i32) -> (i32, i32) {
    %c0_i32 = arith.constant 0 : i32
    %c0_i32_0 = arith.constant 0 : i32
    return %arg1, %c0_i32 : i32, i32
  }
  func.func @transform_3(%arg0: i32, %arg1: i32) -> (i32, i32) {
    %c0_i32 = arith.constant 0 : i32
    %c0_i32_0 = arith.constant 0 : i32
    return %arg0, %c0_i32 : i32, i32
  }
  func.func @transform_4(%arg0: i32, %arg1: i32) -> (i32, i32) {
    %c0_i32 = arith.constant 0 : i32
    %c0_i32_0 = arith.constant 0 : i32
    return %c0_i32, %arg1 : i32, i32
  }
  func.func @transform_5(%arg0: i32, %arg1: i32) -> (i32, i32) {
    %c0_i32 = arith.constant 0 : i32
    %c0_i32_0 = arith.constant 0 : i32
    return %c0_i32, %arg1 : i32, i32
  }
  func.func @transform_6(%arg0: i32, %arg1: i32) -> (i32, i32) {
    %c0_i32 = arith.constant 0 : i32
    %c0_i32_0 = arith.constant 0 : i32
    return %arg0, %c0_i32 : i32, i32
  }
  func.func @transform_7(%arg0: i32, %arg1: i32) -> (i32, i32) {
    %c0_i32 = arith.constant 0 : i32
    %c0_i32_0 = arith.constant 0 : i32
    return %arg0, %c0_i32 : i32, i32
  }
}

</mosaic_0001>

<llo_original>
// kernel: tpu_custom_call.1
$region0: #{tpu_custom_call.1}
  #allocation0 [shape = 'u32[]', space=smem, size = 0x4, offset = 0x4, fixed_abs, tag = 'smem constant byte address 0x4 - core index']
  #allocation1 [shape = 'u32[144,128]{1,0:T(1,128)}', space=vmem, size = 0x12000, scoped, tag = 'internal scratch']
  #allocation2 [shape = 'f32[8,1]{1,0:T(8,128)}', space=vmem, size = 0x1000, scoped, tag = 'scratch operand']
  #allocation3 [shape = 'f32[8,1]{1,0:T(8,128)}', space=vmem, size = 0x1000, scoped, tag = 'scratch operand']
  #allocation4 [shape = 'f32[1,1]{1,0:T(1,128)S(6)}', space=smem, size = 0x200, scoped, tag = 'scoped memory for tpu_custom_call.1']
  %s0 = inlined_call_operand.<no memory space> [shape: f32[1,1], index: 0, kind: input, shape index: {}]
  %s1 = inlined_call_operand.vmem [shape: f32[16,128], index: 1, kind: input, shape index: {}]
  %s2 = inlined_call_operand.hbm [shape: f32[256,128], index: 2, kind: input, shape index: {}]
  %s3 = inlined_call_operand.vmem [shape: f32[16,1], index: 3, kind: input, shape index: {}]
  %s4 = inlined_call_operand.vmem [shape: f32[1,256], index: 4, kind: input, shape index: {}]
  %s5 = inlined_call_operand.vmem [shape: s32[1,256], index: 5, kind: input, shape index: {}]
  %s6 = inlined_call_operand.vmem [shape: s32[16,1], index: 6, kind: input, shape index: {}]
  %s7 = inlined_call_operand.vmem [shape: f32[16,1], index: 7, kind: output, shape index: {}]
  %s8 = sld [smem:[#allocation0]]
  $region73: #{tpu_custom_call.1} parent=0
    _
  %s10 = ssub.s32 1, %s8
  %s11 = scalar_select 0, %s10, %s8
  %12 = sst [smem:[#allocation4]] %s0
  $region1: #{tpu_custom_call.1} parent=0
    #allocation5 [shape = 'u8[131072]{0}', space=vmem, size = 0x20000, scoped, tag = 'input window, operand 2']
    #allocation6 [shape = 's32[2]{0}', space=sflag, size = 0x8, scoped, tag = 'scoped memory for tpu_custom_call.1']
    %13 = vsyncpa [#allocation6], 0
    %s14 = scalar_lea.sflag [#allocation6], 1
    %15 = vsyncpa %s14, 0
    loop: start=0, step=1, limit=6
    $region2: #{tpu_custom_call.1} parent=1 // loop_pre_header
      _
    $region3: #{tpu_custom_call.1} parent=1 // loop_header
      %s17 = sphi 0, %s21
      %p18 = scmp.ge.s32.totalorder %s17, 6
      %s24 = sphi 0, %s36
      %s25 = sphi 0, %s32
      %s26 = sphi 0, %s24
      %s27 = sphi 0, %s25
      %s28 = sphi 0, %s26
      %s29 = sphi 0, %s27
      %s37 = sphi 0, %s37
      %s39 = sphi 0, %s37
      %s40 = sphi 0, %s39
      %s54 = sphi 0, %s40
      %s60 = sphi 0, %s62
      %s63 = sphi 0, %s60
      %s64 = sphi 0, %s63
      %s80 = sphi 0, %s64
      %s86 = sphi 0, %s88
      %s89 = sphi 0, %s86
      %s90 = sphi 0, %s89
      %s106 = sphi 0, %s90
      %s112 = sphi 0, %s114
      %s115 = sphi 0, %s112
      %s116 = sphi 0, %s115
      %s132 = sphi 0, %s116
      %s138 = sphi 0, %s140
      %s141 = sphi 0, %s138
      %s142 = sphi 0, %s141
      %s158 = sphi 0, %s142
      %s164 = sphi 0, %s166
      %s167 = sphi 0, %s164
      %s168 = sphi 0, %s167
      %s184 = sphi 0, %s168
      %s190 = sphi 0, %s192
      %s193 = sphi 0, %s190
      %s194 = sphi 0, %s193
      %s210 = sphi 0, %s194
      %s216 = sphi 0, %s218
      %s219 = sphi 0, %s216
      %s220 = sphi 0, %s219
      %s236 = sphi 0, %s220
    $region4: #{tpu_custom_call.1} parent=1 // loop_header_branch
      %20 = sbr.rel (%p18) target = $region8
    $region5: #{tpu_custom_call.1} parent=1 // loop_body
      %s22 = ssub.s32 %s17, 1
      %s23 = ssub.s32 %s17, 2
      %s30 = sadd.s32 1, %s25
      %p31 = scmp.ge.s32.totalorder %s30, 2
      %s32 = scalar_select %p31, 0, %s30
      %s33 = sadd.s32 1, %s24
      %s34 = scalar_select %p31, %s33, %s24
      %p35 = scmp.ge.s32.totalorder %s34, 2
      %s36 = scalar_select %p35, 0, %s34
      %s38 = sadd.s32 %s37, 1
      %p41 = scmp.eq.s32.totalorder %s17, 3
      %p42 = scmp.ne.s32.totalorder %s37, %s39
      %p43 = scmp.eq.s32.totalorder %s17, 0
      %p44 = por %p42, %p43
      %p45 = scmp.ne.s32.totalorder %s37, %s39
      %p46 = scmp.eq.s32.totalorder %s22, 3
      %p47 = por %p45, %p46
      %p48 = scmp.ne.s32.totalorder %s39, %s40
      %p49 = scmp.eq.s32.totalorder %s22, 0
      %p50 = por %p48, %p49
      %p51 = scmp.ne.s32.totalorder %s39, %s40
      %p52 = scmp.eq.s32.totalorder %s23, 3
      %p53 = por %p51, %p52
      %p55 = scmp.ne.s32.totalorder %s40, %s54
      %p56 = scmp.eq.s32.totalorder %s23, 0
      %p57 = por %p55, %p56
      %s58 = ssub.s32 %s24, %s36
      %p59 = scmp.eq.s32.totalorder %s58, 0
      %s61 = sadd.s32 %s60, 1
      %s62 = scalar_select %p59, %s60, %s61
      %p65 = pneg %p59
      %p66 = scmp.eq.s32.totalorder %s17, 3
      %p67 = por %p65, %p66
      %p68 = scmp.ne.s32.totalorder %s60, %s63
      %p69 = scmp.eq.s32.totalorder %s17, 0
      %p70 = por %p68, %p69
      %p71 = scmp.ne.s32.totalorder %s60, %s63
      %p72 = scmp.eq.s32.totalorder %s22, 3
      %p73 = por %p71, %p72
      %p74 = scmp.ne.s32.totalorder %s63, %s64
      %p75 = scmp.eq.s32.totalorder %s22, 0
      %p76 = por %p74, %p75
      %p77 = scmp.ne.s32.totalorder %s63, %s64
      %p78 = scmp.eq.s32.totalorder %s23, 3
      %p79 = por %p77, %p78
      %p81 = scmp.ne.s32.totalorder %s64, %s80
      %p82 = scmp.eq.s32.totalorder %s23, 0
      %p83 = por %p81, %p82
      %s84 = ssub.s32 %s25, %s32
      %p85 = scmp.eq.s32.totalorder %s84, 0
      %s87 = sadd.s32 %s86, 1
      %s88 = scalar_select %p85, %s86, %s87
      %p91 = pneg %p85
      %p92 = scmp.eq.s32.totalorder %s17, 3
      %p93 = por %p91, %p92
      %p94 = scmp.ne.s32.totalorder %s86, %s89
      %p95 = scmp.eq.s32.totalorder %s17, 0
      %p96 = por %p94, %p95
      %p97 = scmp.ne.s32.totalorder %s86, %s89
      %p98 = scmp.eq.s32.totalorder %s22, 3
      %p99 = por %p97, %p98
      %p100 = scmp.ne.s32.totalorder %s89, %s90
      %p101 = scmp.eq.s32.totalorder %s22, 0
      %p102 = por %p100, %p101
      %p103 = scmp.ne.s32.totalorder %s89, %s90
      %p104 = scmp.eq.s32.totalorder %s23, 3
      %p105 = por %p103, %p104
      %p107 = scmp.ne.s32.totalorder %s90, %s106
      %p108 = scmp.eq.s32.totalorder %s23, 0
      %p109 = por %p107, %p108
      %s110 = ssub.s32 %s24, %s36
      %p111 = scmp.eq.s32.totalorder %s110, 0
      %s113 = sadd.s32 %s112, 1
      %s114 = scalar_select %p111, %s112, %s113
      %p117 = pneg %p111
      %p118 = scmp.eq.s32.totalorder %s17, 3
      %p119 = por %p117, %p118
      %p120 = scmp.ne.s32.totalorder %s112, %s115
      %p121 = scmp.eq.s32.totalorder %s17, 0
      %p122 = por %p120, %p121
      %p123 = scmp.ne.s32.totalorder %s112, %s115
      %p124 = scmp.eq.s32.totalorder %s22, 3
      %p125 = por %p123, %p124
      %p126 = scmp.ne.s32.totalorder %s115, %s116
      %p127 = scmp.eq.s32.totalorder %s22, 0
      %p128 = por %p126, %p127
      %p129 = scmp.ne.s32.totalorder %s115, %s116
      %p130 = scmp.eq.s32.totalorder %s23, 3
      %p131 = por %p129, %p130
      %p133 = scmp.ne.s32.totalorder %s116, %s132
      %p134 = scmp.eq.s32.totalorder %s23, 0
      %p135 = por %p133, %p134
      %s136 = ssub.s32 %s25, %s32
      %p137 = scmp.eq.s32.totalorder %s136, 0
      %s139 = sadd.s32 %s138, 1
      %s140 = scalar_select %p137, %s138, %s139
      %p143 = pneg %p137
      %p144 = scmp.eq.s32.totalorder %s17, 3
      %p145 = por %p143, %p144
      %p146 = scmp.ne.s32.totalorder %s138, %s141
      %p147 = scmp.eq.s32.totalorder %s17, 0
      %p148 = por %p146, %p147
      %p149 = scmp.ne.s32.totalorder %s138, %s141
      %p150 = scmp.eq.s32.totalorder %s22, 3
      %p151 = por %p149, %p150
      %p152 = scmp.ne.s32.totalorder %s141, %s142
      %p153 = scmp.eq.s32.totalorder %s22, 0
      %p154 = por %p152, %p153
      %p155 = scmp.ne.s32.totalorder %s141, %s142
      %p156 = scmp.eq.s32.totalorder %s23, 3
      %p157 = por %p155, %p156
      %p159 = scmp.ne.s32.totalorder %s142, %s158
      %p160 = scmp.eq.s32.totalorder %s23, 0
      %p161 = por %p159, %p160
      %s162 = ssub.s32 %s25, %s32
      %p163 = scmp.eq.s32.totalorder %s162, 0
      %s165 = sadd.s32 %s164, 1
      %s166 = scalar_select %p163, %s164, %s165
      %p169 = pneg %p163
      %p170 = scmp.eq.s32.totalorder %s17, 3
      %p171 = por %p169, %p170
      %p172 = scmp.ne.s32.totalorder %s164, %s167
      %p173 = scmp.eq.s32.totalorder %s17, 0
      %p174 = por %p172, %p173
      %p175 = scmp.ne.s32.totalorder %s164, %s167
      %p176 = scmp.eq.s32.totalorder %s22, 3
      %p177 = por %p175, %p176
      %p178 = scmp.ne.s32.totalorder %s167, %s168
      %p179 = scmp.eq.s32.totalorder %s22, 0
      %p180 = por %p178, %p179
      %p181 = scmp.ne.s32.totalorder %s167, %s168
      %p182 = scmp.eq.s32.totalorder %s23, 3
      %p183 = por %p181, %p182
      %p185 = scmp.ne.s32.totalorder %s168, %s184
      %p186 = scmp.eq.s32.totalorder %s23, 0
      %p187 = por %p185, %p186
      %s188 = ssub.s32 %s24, %s36
      %p189 = scmp.eq.s32.totalorder %s188, 0
      %s191 = sadd.s32 %s190, 1
      %s192 = scalar_select %p189, %s190, %s191
      %p195 = pneg %p189
      %p196 = scmp.eq.s32.totalorder %s17, 3
      %p197 = por %p195, %p196
      %p198 = scmp.ne.s32.totalorder %s190, %s193
      %p199 = scmp.eq.s32.totalorder %s17, 0
      %p200 = por %p198, %p199
      %p201 = scmp.ne.s32.totalorder %s190, %s193
      %p202 = scmp.eq.s32.totalorder %s22, 3
      %p203 = por %p201, %p202
      %p204 = scmp.ne.s32.totalorder %s193, %s194
      %p205 = scmp.eq.s32.totalorder %s22, 0
      %p206 = por %p204, %p205
      %p207 = scmp.ne.s32.totalorder %s193, %s194
      %p208 = scmp.eq.s32.totalorder %s23, 3
      %p209 = por %p207, %p208
      %p211 = scmp.ne.s32.totalorder %s194, %s210
      %p212 = scmp.eq.s32.totalorder %s23, 0
      %p213 = por %p211, %p212
      %s214 = ssub.s32 %s24, %s36
      %p215 = scmp.eq.s32.totalorder %s214, 0
      %s217 = sadd.s32 %s216, 1
      %s218 = scalar_select %p215, %s216, %s217
      %p221 = pneg %p215
      %p222 = scmp.eq.s32.totalorder %s17, 3
      %p223 = por %p221, %p222
      %p224 = scmp.ne.s32.totalorder %s216, %s219
      %p225 = scmp.eq.s32.totalorder %s17, 0
      %p226 = por %p224, %p225
      %p227 = scmp.ne.s32.totalorder %s216, %s219
      %p228 = scmp.eq.s32.totalorder %s22, 3
      %p229 = por %p227, %p228
      %p230 = scmp.ne.s32.totalorder %s219, %s220
      %p231 = scmp.eq.s32.totalorder %s22, 0
      %p232 = por %p230, %p231
      %p233 = scmp.ne.s32.totalorder %s219, %s220
      %p234 = scmp.eq.s32.totalorder %s23, 3
      %p235 = por %p233, %p234
      %p237 = scmp.ne.s32.totalorder %s220, %s236
      %p238 = scmp.eq.s32.totalorder %s23, 0
      %p239 = por %p237, %p238
      %p240 = scmp.le.s32.totalorder 1, %s17
      %p241 = scmp.lt.s32.totalorder %s17, 5
      %p242 = pnand %p240, %p241
      %p243 = pneg %p242
      // Predicated region
      $region9: #{tpu_custom_call.1} parent=5 // pred_check
        _
      $region10: #{tpu_custom_call.1} parent=5 // pred_check_branch
        %245 = sbr.rel (%p242) target = $region12
      $region11: #{tpu_custom_call.1} parent=5 // pred_region
        %s246 = ssub.s32 %s17, 1
        // Predicated region
        $region13: #{tpu_custom_call.1} parent=11 // pred_check
          %p247 = pneg %p50
        $region14: #{tpu_custom_call.1} parent=11 // pred_check_branch
          %249 = sbr.rel (%p247) target = $region16
        $region15: #{tpu_custom_call.1} parent=11 // pred_region
          _
        $region16: #{tpu_custom_call.1} parent=11 // pred_fallthru
          _
      $region12: #{tpu_custom_call.1} parent=5 // pred_fallthru
        _
      %p250 = scmp.lt.s32.totalorder %s17, 4
      // Predicated region
      $region17: #{tpu_custom_call.1} parent=5 // pred_check
        %p251 = pneg %p250
      $region18: #{tpu_custom_call.1} parent=5 // pred_check_branch
        %253 = sbr.rel (%p251) target = $region20
      $region19: #{tpu_custom_call.1} parent=5 // pred_region
        // Predicated region
        $region21: #{tpu_custom_call.1} parent=19 // pred_check
          %p254 = pneg %p70
        $region22: #{tpu_custom_call.1} parent=19 // pred_check_branch
          %256 = sbr.rel (%p254) target = $region24
        $region23: #{tpu_custom_call.1} parent=19 // pred_region
          %p257 = scmp.lt.s32.totalorder %s24, 1
          %s258 = scalar_select %p257, %s24, 1
          %s259 = smul.addr %s258, 8
          %s260 = scalar_lea.vmem %s1, %s259
        $region24: #{tpu_custom_call.1} parent=19 // pred_fallthru
          _
        // Predicated region
        $region25: #{tpu_custom_call.1} parent=19 // pred_check
          %p261 = pneg %p96
        $region26: #{tpu_custom_call.1} parent=19 // pred_check_branch
          %263 = sbr.rel (%p261) target = $region28
        $region27: #{tpu_custom_call.1} parent=19 // pred_region
          %s264 = sand.u32 %s86, 1
          %s265 = scalar_lea.sflag [#allocation6], %s264
          %s266 = sand.u32 %s86, 1
          %s267 = smul.addr %s266, 128
          %s268 = scalar_lea.vmem [#allocation5], %s267
          %s269 = smul.u32 16, %s25
          %s271 = ssub.s32 2048, 2048
          %272 = vsyncadd %s265, %s271
          %s273 = smul.addr %s269, 128
          %s274 = scalar_lea.hbm %s2, %s273
          %s275 = sshll.u32 %s268, 4
          %s276 = int_to_ptr.vmem [resolvable:$true] %s275
          %281 = dma.hbm_to_vmem [thread:$0]  %s274, 2048, %s276, %s265, 128, 128, 8
        $region28: #{tpu_custom_call.1} parent=19 // pred_fallthru
          _
        // Predicated region
        $region29: #{tpu_custom_call.1} parent=19 // pred_check
          %p282 = pneg %p122
        $region30: #{tpu_custom_call.1} parent=19 // pred_check_branch
          %284 = sbr.rel (%p282) target = $region32
        $region31: #{tpu_custom_call.1} parent=19 // pred_region
          %p285 = scmp.lt.s32.totalorder %s24, 1
          %s286 = scalar_select %p285, %s24, 1
          %s287 = smul.addr %s286, 8
          %s288 = scalar_lea.vmem %s3, %s287
        $region32: #{tpu_custom_call.1} parent=19 // pred_fallthru
          _
        // Predicated region
        $region33: #{tpu_custom_call.1} parent=19 // pred_check
          %p289 = pneg %p148
        $region34: #{tpu_custom_call.1} parent=19 // pred_check_branch
          %291 = sbr.rel (%p289) target = $region36
        $region35: #{tpu_custom_call.1} parent=19 // pred_region
          %p292 = scmp.lt.s32.totalorder %s25, 1
          %s293 = scalar_select %p292, %s25, 1
          %s294 = scalar_lea.vmem %s4, %s293
        $region36: #{tpu_custom_call.1} parent=19 // pred_fallthru
          _
        // Predicated region
        $region37: #{tpu_custom_call.1} parent=19 // pred_check
          %p295 = pneg %p174
        $region38: #{tpu_custom_call.1} parent=19 // pred_check_branch
          %297 = sbr.rel (%p295) target = $region40
        $region39: #{tpu_custom_call.1} parent=19 // pred_region
          %p298 = scmp.lt.s32.totalorder %s25, 1
          %s299 = scalar_select %p298, %s25, 1
          %s300 = scalar_lea.vmem %s5, %s299
        $region40: #{tpu_custom_call.1} parent=19 // pred_fallthru
          _
        // Predicated region
        $region41: #{tpu_custom_call.1} parent=19 // pred_check
          %p301 = pneg %p200
        $region42: #{tpu_custom_call.1} parent=19 // pred_check_branch
          %303 = sbr.rel (%p301) target = $region44
        $region43: #{tpu_custom_call.1} parent=19 // pred_region
          %p304 = scmp.lt.s32.totalorder %s24, 1
          %s305 = scalar_select %p304, %s24, 1
          %s306 = smul.addr %s305, 8
          %s307 = scalar_lea.vmem %s6, %s306
        $region44: #{tpu_custom_call.1} parent=19 // pred_fallthru
          _
      $region20: #{tpu_custom_call.1} parent=5 // pred_fallthru
        _
      %p308 = scmp.le.s32.totalorder 1, %s17
      %p309 = scmp.lt.s32.totalorder %s17, 5
      %p310 = pnand %p308, %p309
      %p311 = pneg %p310
      // Predicated region
      $region45: #{tpu_custom_call.1} parent=5 // pred_check
        _
      $region46: #{tpu_custom_call.1} parent=5 // pred_check_branch
        %313 = sbr.rel (%p310) target = $region48
      $region47: #{tpu_custom_call.1} parent=5 // pred_region
        %s314 = ssub.s32 %s17, 1
        %s315 = sand.u32 %s89, 1
        %s316 = scalar_lea.sflag [#allocation6], %s315
        %s317 = sand.u32 %s89, 1
        %s318 = smul.addr %s317, 128
        %s319 = scalar_lea.vmem [#allocation5], %s318
        // Predicated region
        $region49: #{tpu_custom_call.1} parent=47 // pred_check
          %p320 = pneg %p102
        $region50: #{tpu_custom_call.1} parent=47 // pred_check_branch
          %322 = sbr.rel (%p320) target = $region52
        $region51: #{tpu_custom_call.1} parent=47 // pred_region
          %323 = dma.done %s316, 2048
        $region52: #{tpu_custom_call.1} parent=47 // pred_fallthru
          _
        %p324 = pneg %p50
        %p325 = pneg %p47
        %p326 = scmp.lt.s32.totalorder %s26, 1
        %s327 = scalar_select %p326, %s26, 1
        %s328 = smul.addr %s327, 8
        %s329 = scalar_lea.vmem %s1, %s328
        %p330 = pneg %p76
        %p331 = pneg %p73
        %s332 = sand.u32 %s89, 1
        %s333 = scalar_lea.sflag [#allocation6], %s332
        %s334 = sand.u32 %s89, 1
        %s335 = smul.addr %s334, 128
        %s336 = scalar_lea.vmem [#allocation5], %s335
        %p337 = pneg %p102
        %p338 = pneg %p99
        %p339 = scmp.lt.s32.totalorder %s26, 1
        %s340 = scalar_select %p339, %s26, 1
        %s341 = smul.addr %s340, 8
        %s342 = scalar_lea.vmem %s3, %s341
        %p343 = pneg %p128
        %p344 = pneg %p125
        %p345 = scmp.lt.s32.totalorder %s27, 1
        %s346 = scalar_select %p345, %s27, 1
        %s347 = scalar_lea.vmem %s4, %s346
        %p348 = pneg %p154
        %p349 = pneg %p151
        %p350 = scmp.lt.s32.totalorder %s27, 1
        %s351 = scalar_select %p350, %s27, 1
        %s352 = scalar_lea.vmem %s5, %s351
        %p353 = pneg %p180
        %p354 = pneg %p177
        %p355 = scmp.lt.s32.totalorder %s26, 1
        %s356 = scalar_select %p355, %s26, 1
        %s357 = smul.addr %s356, 8
        %s358 = scalar_lea.vmem %s6, %s357
        %p359 = pneg %p206
        %p360 = pneg %p203
        %p361 = pneg %p232
        %p362 = pneg %p229
        %p363 = scmp.lt.s32.totalorder %s26, 1
        %s364 = scalar_select %p363, %s26, 1
        %s365 = smul.addr %s364, 8
        %s366 = scalar_lea.vmem %s7, %s365
        %p367 = scmp.lt.s32.totalorder %s26, 1
        %s368 = scalar_select %p367, %s26, 1
        %s369 = smul.addr %s368, 8
        %s370 = scalar_lea.vmem %s1, %s369
        %s371 = smul.u32 16, %s27
        %p372 = scmp.lt.s32.totalorder %s26, 1
        %s373 = scalar_select %p372, %s26, 1
        %s374 = smul.addr %s373, 8
        %s375 = scalar_lea.vmem %s3, %s374
        %p376 = scmp.lt.s32.totalorder %s27, 1
        %s377 = scalar_select %p376, %s27, 1
        %s378 = scalar_lea.vmem %s4, %s377
        %p379 = scmp.lt.s32.totalorder %s27, 1
        %s380 = scalar_select %p379, %s27, 1
        %s381 = scalar_lea.vmem %s5, %s380
        %p382 = scmp.lt.s32.totalorder %s26, 1
        %s383 = scalar_select %p382, %s26, 1
        %s384 = smul.addr %s383, 8
        %s385 = scalar_lea.vmem %s6, %s384
        %p386 = scmp.lt.s32.totalorder %s26, 1
        %s387 = scalar_select %p386, %s26, 1
        %s388 = smul.addr %s387, 8
        %s389 = scalar_lea.vmem %s7, %s388
        %p390 = scmp.eq.s32.totalorder %s27, 0
        // Predicated region
        $region53: #{tpu_custom_call.1} parent=47 // pred_check
          %p391 = pneg %p390
        $region54: #{tpu_custom_call.1} parent=47 // pred_check_branch
          %393 = sbr.rel (%p391) target = $region56
        $region55: #{tpu_custom_call.1} parent=47 // pred_region
          %vm394 = vcmask 7168
          %395 = vst.msk [vmem:[#allocation2] sm:$0xff] %vm394, 0.0
          %396 = vst.msk [vmem:[#allocation3] sm:$0xff] %vm394, 0.0
        $region56: #{tpu_custom_call.1} parent=47 // pred_fallthru
          _
        %s397 = sld [smem:[#allocation4]]
        %v398 = vld [vmem:[%s370] sm:$0xff]
        %v399 = vld [vmem:[%s319] sm:$0xff]
        %v400 = vld [vmem:[%s319 + $0x8] sm:$0xff]
        %v401 = vld [vmem:[%s319 + $0x10] sm:$0xff]
        %v402 = vld [vmem:[%s319 + $0x18] sm:$0xff]
        %v403 = vld [vmem:[%s319 + $0x20] sm:$0xff]
        %v404 = vld [vmem:[%s319 + $0x28] sm:$0xff]
        %v405 = vld [vmem:[%s319 + $0x30] sm:$0xff]
        %v406 = vld [vmem:[%s319 + $0x38] sm:$0xff]
        %v407 = vld [vmem:[%s319 + $0x40] sm:$0xff]
        %v408 = vld [vmem:[%s319 + $0x48] sm:$0xff]
        %v409 = vld [vmem:[%s319 + $0x50] sm:$0xff]
        %v410 = vld [vmem:[%s319 + $0x58] sm:$0xff]
        %v411 = vld [vmem:[%s319 + $0x60] sm:$0xff]
        %v412 = vld [vmem:[%s319 + $0x68] sm:$0xff]
        %v413 = vld [vmem:[%s319 + $0x70] sm:$0xff]
        %v414 = vld [vmem:[%s319 + $0x78] sm:$0xff]
        %415 = vmatprep.subr.mxu0 0.0
        %416 = vmatpush1.xpose.msra.mxu0 %v399
        %417 = vmatprep.subr.mxu0 0.0
        %418 = vmatpush1.xpose.msra.mxu0 %v400
        %419 = vmatprep.subr.mxu0 0.0
        %420 = vmatpush1.xpose.msra.mxu0 %v401
        %421 = vmatprep.subr.mxu0 0.0
        %422 = vmatpush1.xpose.msra.mxu0 %v402
        %423 = vmatprep.subr.mxu0 0.0
        %424 = vmatpush1.xpose.msra.mxu0 %v403
        %425 = vmatprep.subr.mxu0 0.0
        %426 = vmatpush1.xpose.msra.mxu0 %v404
        %427 = vmatprep.subr.mxu0 0.0
        %428 = vmatpush1.xpose.msra.mxu0 %v405
        %429 = vmatprep.subr.mxu0 0.0
        %430 = vmatpush1.xpose.msra.mxu0 %v406
        %431 = vmatprep.subr.mxu0 0.0
        %432 = vmatpush1.xpose.msra.mxu0 %v407
        %433 = vmatprep.subr.mxu0 0.0
        %434 = vmatpush1.xpose.msra.mxu0 %v408
        %435 = vmatprep.subr.mxu0 0.0
        %436 = vmatpush1.xpose.msra.mxu0 %v409
        %437 = vmatprep.subr.mxu0 0.0
        %438 = vmatpush1.xpose.msra.mxu0 %v410
        %439 = vmatprep.subr.mxu0 0.0
        %440 = vmatpush1.xpose.msra.mxu0 %v411
        %441 = vmatprep.subr.mxu0 0.0
        %442 = vmatpush1.xpose.msra.mxu0 %v412
        %443 = vmatprep.subr.mxu0 0.0
        %444 = vmatpush1.xpose.msra.mxu0 %v413
        %445 = vmatprep.subr.mxu0 0.0
        %446 = vmatpush1.xpose.msra.mxu0 %v414
        %447 = vmatprep.subr.mxu0 0.0
        %448 = vmatpush1.xpose.msra.mxu0 0.0
        %449 = vmatprep.subr.mxu0 0.0
        %450 = vmatpush1.xpose.msra.mxu0 0.0
        %451 = vmatprep.subr.mxu0 0.0
        %452 = vmatpush1.xpose.msra.mxu0 0.0
        %453 = vmatprep.subr.mxu0 0.0
        %454 = vmatpush1.xpose.msra.mxu0 0.0
        %455 = vmatprep.subr.mxu0 0.0
        %456 = vmatpush1.xpose.msra.mxu0 0.0
        %457 = vmatprep.subr.mxu0 0.0
        %458 = vmatpush1.xpose.msra.mxu0 0.0
        %459 = vmatprep.subr.mxu0 0.0
        %460 = vmatpush1.xpose.msra.mxu0 0.0
        %461 = vmatprep.subr.mxu0 0.0
        %462 = vmatpush1.xpose.msra.mxu0 0.0
        %463 = vmatprep.subr.mxu0 0.0
        %464 = vmatpush1.xpose.msra.mxu0 0.0
        %465 = vmatprep.subr.mxu0 0.0
        %466 = vmatpush1.xpose.msra.mxu0 0.0
        %467 = vmatprep.subr.mxu0 0.0
        %468 = vmatpush1.xpose.msra.mxu0 0.0
        %469 = vmatprep.subr.mxu0 0.0
        %470 = vmatpush1.xpose.msra.mxu0 0.0
        %471 = vmatprep.subr.mxu0 0.0
        %472 = vmatpush1.xpose.msra.mxu0 0.0
        %473 = vmatprep.subr.mxu0 0.0
        %474 = vmatpush1.xpose.msra.mxu0 0.0
        %475 = vmatprep.subr.mxu0 0.0
        %476 = vmatpush1.xpose.msra.mxu0 0.0
        %477 = vmatprep.subr.mxu0 0.0
        %478 = vmatpush1.xpose.msra.mxu0 0.0
        %479 = vmatprep.mubr.f32.mxu0 0.0
        %480 = vmatmul.mubr.f32.gmra.mrb[0].mxu0 %v398
        %v481 = vpop.f32.mrb[0].mxu0
        %v482 = vadd.f32 0.0, %v481
        %v483 = vpop.f32.mrb[0].mxu0
        %484 = vdwg.mxu0
        %v485 = vld [vmem:[%s375] sm:$0xff]
        %487 = vset.pattern.permute.xlu0 0
        %488 = vperm.xlu0 %487, %v485
        %v489 = vpop.permute.xlu0 %488
        %v491 = vmul.f32 %v482, %v489
        %v492 = vld [vmem:[%s378] sm:$0x1]
        %v494 = vlaneseq
        %v495 = vshrl.u32 %v494, 7
        %v496 = vsub.s32 0, %v495
        %v497 = vrot.slane %v492, %v496
        %v499 = vmul.f32 %v491, %v497
        %v500 = vstv %s397
        %v501 = vsub.f32 %v499, %v500
        %v502 = vld [vmem:[%s381] sm:$0x1]
        %v503 = vld [vmem:[%s385] sm:$0xff]
        %v504 = vlaneseq
        %v505 = vshrl.u32 %v504, 7
        %v506 = vsub.s32 0, %v505
        %v507 = vrot.slane %v502, %v506
        %508 = vset.pattern.permute.xlu0 0
        %509 = vperm.xlu0 %508, %v503
        %v510 = vpop.permute.xlu0 %509
        %vm511 = vcmp.eq.s32.totalorder %v507, %v510
        %v512 = vld [vmem:[#allocation2] sm:$0xff]
        %v513 = vsel %vm511, %v501, 0.0
        %514 = vadd.xlane.f32.xlu0 %v513
        %v515 = vpop.xlane.xlu0 %514
        %v516 = vadd.f32 %v512, %v515
        %vm517 = vcmask 7168
        %518 = vst.msk [vmem:[#allocation2] sm:$0xff] %vm517, %v516
        %v519 = vld [vmem:[#allocation3] sm:$0xff]
        %v520 = vmul.f32 %v501, 1.442695
        %v521 = vpow.pop %v520
        %522 = vadd.xlane.f32.xlu0 %v521
        %v523 = vpop.xlane.xlu0 %522
        %v524 = vadd.f32 %v519, %v523
        %525 = vst.msk [vmem:[#allocation3] sm:$0xff] %vm517, %v524
        %p526 = scmp.eq.s32.totalorder %s27, 1
        // Predicated region
        $region57: #{tpu_custom_call.1} parent=47 // pred_check
          %p527 = pneg %p526
        $region58: #{tpu_custom_call.1} parent=47 // pred_check_branch
          %529 = sbr.rel (%p527) target = $region60
        $region59: #{tpu_custom_call.1} parent=47 // pred_region
          %v530 = vld [vmem:[#allocation2] sm:$0xff]
          %v531 = vld [vmem:[#allocation3] sm:$0xff]
          %s532 = ssub.f32 0.0, %s397
          %v533 = vstv %s532
          %v534 = vmul.f32 %v533, 1.442695
          %v535 = vpow.pop %v534
          %s536 = vtos %v535
          %s537 = smul.f32 %s536, 56.0
          %v538 = vstv %s537
          %v539 = vsub.f32 %v531, %v538
          %v540 = vmul.f32 %v530, 1.442695
          %v541 = vpow.pop %v540
          %v542 = vsub.f32 %v539, %v541
          %v543 = vmax.f32 %v542, 0.0
          %s544 = smul.f32 %s397, 0.8
          %v545 = vstv %s544
          %v546 = vadd.f32 %v530, %v545
          %v547 = vsub.f32 %v546, %v500
          %s548 = smul.f32 %s397, 0.2
          %v549 = vstv %s548
          %v550 = vsub.f32 %v530, %v549
          %v551 = vmul.f32 %v550, 1.442695
          %v552 = vpow.pop %v551
          %v553 = vadd.f32 %v552, %v543
          %v554 = vlog2.pop %v553
          %v555 = vmul.f32 %v554, 0.6931472
          %v556 = vsub.f32 %v547, %v555
          %557 = vst.msk [vmem:[%s389] sm:$0xff] %vm517, %v556
        $region60: #{tpu_custom_call.1} parent=47 // pred_fallthru
          _
        %p558 = scmp.lt.s32.totalorder %s26, 1
        %s559 = scalar_select %p558, %s26, 1
        %s560 = smul.addr %s559, 8
        %s561 = scalar_lea.vmem %s7, %s560
        // Predicated region
        $region61: #{tpu_custom_call.1} parent=47 // pred_check
          %p562 = pneg %p229
        $region62: #{tpu_custom_call.1} parent=47 // pred_check_branch
          %564 = sbr.rel (%p562) target = $region64
        $region63: #{tpu_custom_call.1} parent=47 // pred_region
          _
        $region64: #{tpu_custom_call.1} parent=47 // pred_fallthru
          _
      $region48: #{tpu_custom_call.1} parent=5 // pred_fallthru
        _
      %p565 = scmp.le.s32.totalorder 2, %s17
      // Predicated region
      $region65: #{tpu_custom_call.1} parent=5 // pred_check
        %p566 = pneg %p565
      $region66: #{tpu_custom_call.1} parent=5 // pred_check_branch
        %568 = sbr.rel (%p566) target = $region68
      $region67: #{tpu_custom_call.1} parent=5 // pred_region
        %s569 = ssub.s32 %s17, 2
        // Predicated region
        $region69: #{tpu_custom_call.1} parent=67 // pred_check
          %p570 = pneg %p235
        $region70: #{tpu_custom_call.1} parent=67 // pred_check_branch
          %572 = sbr.rel (%p570) target = $region72
        $region71: #{tpu_custom_call.1} parent=67 // pred_region
          %p573 = scmp.lt.s32.totalorder %s28, 1
          %s574 = scalar_select %p573, %s28, 1
          %s575 = smul.addr %s574, 8
          %s576 = scalar_lea.vmem %s7, %s575
        $region72: #{tpu_custom_call.1} parent=67 // pred_fallthru
          _
      $region68: #{tpu_custom_call.1} parent=5 // pred_fallthru
        _
    $region6: #{tpu_custom_call.1} parent=1 // loop_footer
      %s21 = sadd.s32 1, %s17
    $region7: #{tpu_custom_call.1} parent=1 // loop_footer_branch
      %16 = sbr.rel target = $region3
    $region8: #{tpu_custom_call.1} parent=1 // loop_exit
      _
    %577 = vsyncpa [#allocation6], 1
    %s578 = scalar_lea.sflag [#allocation6], 1
    %579 = vsyncpa %s578, 1

</llo_original>
